<compile_context>
chip_gen: v5e
topology: v5e:2x2
jax: 0.10.0
libtpu: 0.0.40
codegen_flags: <defaults>
</compile_context>

<pallas_src>
import functools

import jax
import jax.numpy as jnp
from jax.experimental import pallas as pl
from jax.experimental.pallas import tpu as pltpu

_MIB = 1024 * 1024


# --------------------------------------------------------------------------------------------
# helpers
# --------------------------------------------------------------------------------------------
def _layernorm(x, gamma, beta, eps=1e-5):
    mu = jnp.mean(x, axis=-1, keepdims=True)
    var = jnp.mean((x - mu) ** 2, axis=-1, keepdims=True)
    return (x - mu) * jax.lax.rsqrt(var + eps) * gamma + beta


def _const_spec(shape, buffer_count):
    """BlockSpec for a grid-invariant operand (weights / biases / LN params)."""
    zeros = (0,) * len(shape)
    index_map = lambda b, i: zeros
    if buffer_count is None:
        return pl.BlockSpec(shape, index_map)
    # Constant index_map => DMA'd once; Buffered(1) keeps it single-buffered in VMEM.
    return pl.BlockSpec(shape, index_map, pipeline_mode=pl.Buffered(buffer_count))


def _vmem_cap_bytes():
    """Physical VMEM of the current generation minus headroom for compiler internal scratch."""
    try:
        phys = int(pltpu.get_tpu_info().vmem_capacity_bytes)
    except Exception:
        phys = 64 * _MIB                       # conservative (v7x-sized) fallback
    return phys - max(8 * _MIB, phys // 8)     # 64 MiB -> 56 MiB, 128 MiB -> 112 MiB


def _default_q_tile(S, vmem_cap):
    """v6e (2x256 MXU, 128 MiB VMEM): 256-row tiles; v5e (4x128 MXU) / v7x (64 MiB VMEM): 128."""
    try:
        kind = jax.devices()[0].device_kind.lower()
    except Exception:
        kind = ""
    tile = 256 if ("v6" in kind and vmem_cap > 80 * _MIB) else 128
    tile = min(tile, S)
    while tile > 8 and S % tile:
        tile //= 2
    return tile


# --------------------------------------------------------------------------------------------
# kernel 1: K/V projection (computed once per row, NOT once per query tile)
# --------------------------------------------------------------------------------------------
def _kv_proj_kernel(x_ref, wv_ref, bv_ref, wk_ref, bk_ref, k_ref, v_ref, *, compute_dtype):
    cd = compute_dtype
    xc = x_ref[0].astype(cd)                                       # (rows, D)
    # *** Intentional swap (mirrors the PyTorch forward): K <- linear_v, V <- linear_k. ***
    k = jnp.dot(xc, wv_ref[...], preferred_element_type=jnp.float32) + bv_ref[...]
    v = jnp.dot(xc, wk_ref[...], preferred_element_type=jnp.float32) + bk_ref[...]
    k_ref[0] = k.astype(k_ref.dtype)
    v_ref[0] = v.astype(v_ref.dtype)


def _project_kv(x, wvT, bv, wkT, bk, *, row_tile, compute_dtype, weight_buffer_count):
    B, S, D = x.shape
    cd = jnp.dtype(compute_dtype)
    n_rt = S // row_tile
    io_spec = pl.BlockSpec((1, row_tile, D), lambda b, r: (b, r, 0))
    out_sds = jax.ShapeDtypeStruct((B, S, D), cd)
    cost = pl.CostEstimate(
        flops=int(4 * B * S * D * D),
        transcendentals=0,
        bytes_accessed=int(x.size * 4 + 2 * B * S * D * cd.itemsize + 2 * D * D * cd.itemsize),
    )
    return pl.pallas_call(
        functools.partial(_kv_proj_kernel, compute_dtype=cd),
        out_shape=(out_sds, out_sds),
        grid_spec=pltpu.PrefetchScalarGridSpec(
            num_scalar_prefetch=0,
            grid=(B, n_rt),
            in_specs=[
                io_spec,
                _const_spec((D, D), weight_buffer_count), _const_spec((1, D), weight_buffer_count),
                _const_spec((D, D), weight_buffer_count), _const_spec((1, D), weight_buffer_count),
            ],
            out_specs=(io_spec, io_spec),
        ),
        compiler_params=pltpu.CompilerParams(
            dimension_semantics=("parallel", "parallel")),
        cost_estimate=cost,
    )(x, wvT, bv, wkT, bk)


# --------------------------------------------------------------------------------------------
# kernel 2: per-query-tile attention + output projection + FFN + both LayerNorms
# --------------------------------------------------------------------------------------------
def _encoder_kernel(xq_ref, mask_ref, k_ref, v_ref,
                    wq_ref, bq_ref, wo_ref, bo_ref,
                    g1_ref, be1_ref, w1_ref, b1_ref, w2_ref, b2_ref,
                    g2_ref, be2_ref, out_ref,
                    *, n_heads, compute_dtype, approx_recip):
    cd = compute_dtype
    d_model = xq_ref.shape[-1]
    hd = d_model // n_heads

    xq = xq_ref[0]                                                 # (tq, D) f32 residual path
    tq = xq.shape[0]

    # Q projection.  1/sqrt(head_dim) is already folded into wq/bq by the wrapper.
    q = (jnp.dot(xq.astype(cd), wq_ref[...], preferred_element_type=jnp.float32)
         + bq_ref[...]).astype(cd)                                 # (tq, D)

    mask = mask_ref[0]                                             # (tq, S) or (1, S) int8

    # Per-head attention, with the head merge fused into a per-head output-projection
    # accumulate (no ctx slab, no masked lane-partial stores).
    attn = jnp.zeros((tq, d_model), jnp.float32)
    for h in range(n_heads):
        lo, hi = h * hd, (h + 1) * hd
        qh = q[:, lo:hi]                                           # (tq, hd)
        kh = k_ref[0, :, lo:hi]                                    # (S, hd)  compute dtype
        vh = v_ref[0, :, lo:hi]                                    # (S, hd)
        # contraction over the trailing dim -> no kh transpose
        s = jax.lax.dot_general(qh, kh, (((1,), (1,)), ((), ())),
                                preferred_element_type=jnp.float32)        # (tq, S)
        s = jnp.where(mask != 0, jnp.float32(-1e9), s)
        s = s - jnp.max(s, axis=-1, keepdims=True)
        p = jnp.exp(s)
        p = p * pl.reciprocal(jnp.sum(p, axis=-1, keepdims=True), approx=approx_recip)
        ctx_h = jnp.dot(p.astype(cd), vh, preferred_element_type=jnp.float32)  # (tq, hd)
        # head merge == ctx @ Wo restricted to this head's rows of Wo
        attn = attn + jnp.dot(ctx_h.astype(cd), wo_ref[lo:hi, :],
                              preferred_element_type=jnp.float32)
    attn = attn + bo_ref[...]

    # dropout1 = identity (inference) -> residual -> LayerNorm1
    y = _layernorm(xq + attn, g1_ref[...], be1_ref[...])

    # FFN: relu(linear1) -> linear2 ; dropout2 = identity -> residual -> LayerNorm2
    h1 = jnp.dot(y.astype(cd), w1_ref[...], preferred_element_type=jnp.float32) + b1_ref[...]
    h1 = jnp.maximum(h1, 0.0)
    h2 = jnp.dot(h1.astype(cd), w2_ref[...], preferred_element_type=jnp.float32) + b2_ref[...]
    out_ref[0] = _layernorm(y + h2, g2_ref[...], be2_ref[...]).astype(out_ref.dtype)


# --------------------------------------------------------------------------------------------
# wrapper
# --------------------------------------------------------------------------------------------
def qbw_encoder_layer(x, attn_mask, params, *, n_heads, q_tile=None,
                      compute_dtype=jnp.bfloat16, out_dtype=jnp.float32,
                      weight_buffer_count=1):
    """QBWEncoderLayer forward.

    x         : (B, S, D) float32
    attn_mask : (B, S) key-padding mask or (B, S, S) full mask; nonzero/True = masked (-1e9)
    params    : torch-convention weights (w*: (out, in)), biases / LN params: (dim,)
    """
    B, S, D = x.shape
    d_ff = params["w1"].shape[0]
    assert D % n_heads == 0
    head_dim = D // n_heads

    vmem_cap = _vmem_cap_bytes()
    if q_tile is None:
        q_tile = _default_q_tile(S, vmem_cap)
    assert S % q_tile == 0 and q_tile % 8 == 0
    n_qt = S // q_tile

    cd = jnp.dtype(compute_dtype)
    x = x.astype(jnp.float32)
    scale = 1.0 / (head_dim ** 0.5)

    def t(w, s=1.0):    # torch (out, in) -> (in, out), optional constant scale, cast to MXU dtype
        return (jnp.asarray(w, jnp.float32).T * s).astype(cd)

    def row(b, s=1.0):  # biases / LN params stay f32 (added to f32 accumulators / f32 stats)
        return (jnp.asarray(b, jnp.float32) * s).reshape(1, -1)

    # 1/sqrt(head_dim) folded into the Q projection (one-time constant weight transform).
    wq, bq = t(params["wq"], scale), row(params["bq"], scale)
    wo, bo = t(params["wo"]), row(params["bo"])
    w1, b1 = t(params["w1"]), row(params["b1"])
    w2, b2 = t(params["w2"]), row(params["b2"])
    g1, be1 = row(params["gamma1"]), row(params["beta1"])
    g2, be2 = row(params["gamma2"]), row(params["beta2"])

    # K/V projections once per row (NOT per query tile).  Note the intentional k/v weight swap.
    k_proj, v_proj = _project_kv(
        x, t(params["wv"]), row(params["bv"]), t(params["wk"]), row(params["bk"]),
        row_tile=q_tile, compute_dtype=cd, weight_buffer_count=weight_buffer_count)

    # Mask as int8 (nonzero = masked).
    if attn_mask.ndim == 2:            # (B, S) key-padding mask, broadcast over queries in-kernel
        mask_i8 = (attn_mask != 0).astype(jnp.int8).reshape(B, 1, S)
        mask_spec = pl.BlockSpec((1, 1, S), lambda b, qi: (b, 0, 0))
        mask_block_bytes = S
    else:                              # (B, Sq, Sk) full attention mask
        assert attn_mask.shape == (B, S, S)
        mask_i8 = (attn_mask != 0).astype(jnp.int8)
        mask_spec = pl.BlockSpec((1, q_tile, S), lambda b, qi: (b, qi, 0))
        mask_block_bytes = q_tile * S

    wb = weight_buffer_count
    in_specs = [
        pl.BlockSpec((1, q_tile, D), lambda b, qi: (b, qi, 0)),    # query rows (f32)
        mask_spec,                                                 # int8 mask
        pl.BlockSpec((1, S, D), lambda b, qi: (b, 0, 0)),          # K (compute dtype)
        pl.BlockSpec((1, S, D), lambda b, qi: (b, 0, 0)),          # V (compute dtype)
        _const_spec((D, D), wb), _const_spec((1, D), wb),          # wq, bq (scaled)
        _const_spec((D, D), wb), _const_spec((1, D), wb),          # wo, bo
        _const_spec((1, D), wb), _const_spec((1, D), wb),          # gamma1, beta1
        _const_spec((D, d_ff), wb), _const_spec((1, d_ff), wb),    # w1^T, b1
        _const_spec((d_ff, D), wb), _const_spec((1, D), wb),       # w2^T, b2
        _const_spec((1, D), wb), _const_spec((1, D), wb),          # gamma2, beta2
    ]

    # VMEM budget: single-buffered weights + double-buffered streamed blocks + intermediates,
    # capped with headroom below the physical per-core VMEM of the current generation.
    n_wbufs = wb if wb is not None else 2
    w_bytes = n_wbufs * ((2 * D * D + 2 * D * d_ff) * cd.itemsize + (8 * D + 2 * d_ff) * 4)
    stream = 2 * (q_tile * D * 4 + 2 * S * D * cd.itemsize + mask_block_bytes
                  + q_tile * D * jnp.dtype(out_dtype).itemsize)
    interm = 4 * (6 * q_tile * D + 2 * q_tile * S + 2 * q_tile * d_ff)
    vmem_limit = int(min(vmem_cap, max(32 * _MIB, w_bytes + stream + 2 * interm)))

    flops = 2 * B * S * (D * D + 2 * S * D + D * D + 2 * D * d_ff)
    cost = pl.CostEstimate(
        flops=int(flops),
        transcendentals=int(B * n_heads * S * S),
        bytes_accessed=int(x.size * 4 + 2 * B * S * D * cd.itemsize + mask_i8.size
                           + (2 * D * D + 2 * D * d_ff) * cd.itemsize
                           + B * S * D * jnp.dtype(out_dtype).itemsize),
    )

    kernel = functools.partial(
        _encoder_kernel, n_heads=n_heads, compute_dtype=cd,
        approx_recip=(cd != jnp.dtype(jnp.float32)))

    return pl.pallas_call(
        kernel,
        out_shape=jax.ShapeDtypeStruct((B, S, D), out_dtype),
        grid_spec=pltpu.PrefetchScalarGridSpec(
            num_scalar_prefetch=0,
            grid=(B, n_qt),
            in_specs=in_specs,
            out_specs=pl.BlockSpec((1, q_tile, D), lambda b, qi: (b, qi, 0)),
        ),
        compiler_params=pltpu.CompilerParams(
            dimension_semantics=("parallel", "parallel"),
            vmem_limit_bytes=vmem_limit,
        ),
        cost_estimate=cost,
    )(x, mask_i8, k_proj, v_proj,
      wq, bq, wo, bo, g1, be1, w1, b1, w2, b2, g2, be2)


# --------------------------------------------------------------------------------------------
# pure-JAX reference (mirrors the PyTorch forward, including the k/v swap)
# --------------------------------------------------------------------------------------------
def _reference(x, attn_mask, params, *, n_heads):
    B, S, D = x.shape
    hd = D // n_heads
    if attn_mask.ndim == 2:
        masked = attn_mask[:, None, None, :] != 0
    else:
        masked = attn_mask[:, None, :, :] != 0
    add_mask = jnp.where(masked, -1e9, 0.0).astype(jnp.float32)

    def lin(v, w, b):
        return jnp.einsum("bsi,oi->bso", v, w) + b

    q = lin(x, params["wq"], params["bq"])
    k = lin(x, params["wv"], params["bv"])   # swapped, as in the PyTorch forward
    v = lin(x, params["wk"], params["bk"])

    def split(t):
        return t.reshape(B, S, n_heads, hd).transpose(0, 2, 1, 3)

    qh, kh, vh = split(q), split(k), split(v)
    s = jnp.einsum("bhqd,bhkd->bhqk", qh, kh) / (hd ** 0.5) + add_mask
    p = jax.nn.softmax(s, axis=-1)
    ctx = jnp.einsum("bhqk,bhkd->bhqd", p, vh).transpose(0, 2, 1, 3).reshape(B, S, D)

    def ln(t, g, b, eps=1e-5):
        mu = t.mean(-1, keepdims=True)
        var = ((t - mu) ** 2).mean(-1, keepdims=True)
        return (t - mu) / jnp.sqrt(var + eps) * g + b

    y = ln(x + lin(ctx, params["wo"], params["bo"]), params["gamma1"], params["beta1"])
    h = jax.nn.relu(lin(y, params["w1"], params["b1"]))
    return ln(y + lin(h, params["w2"], params["b2"]), params["gamma2"], params["beta2"])


if __name__ == "__main__":
    # Small but TPU-native shapes: D, S multiples of 128 -> lane-dense stores.
    B, S, D = 2, 128, 128
    n_heads, d_ff = 4, 256
    q_tile = 64     # two query tiles per sequence -> exercises the (batch, q-tile) grid

    key = jax.random.PRNGKey(0)
    keys = jax.random.split(key, 18)

    def w(k, shape, scale=0.05):
        return jax.random.normal(k, shape, dtype=jnp.float32) * scale

    params = {
        "wq": w(keys[0], (D, D)), "bq": w(keys[1], (D,)),
        "wk": w(keys[2], (D, D)), "bk": w(keys[3], (D,)),
        "wv": w(keys[4], (D, D)), "bv": w(keys[5], (D,)),
        "wo": w(keys[6], (D, D)), "bo": w(keys[7], (D,)),
        "w1": w(keys[8], (d_ff, D)), "b1": w(keys[9], (d_ff,)),
        "w2": w(keys[10], (D, d_ff)), "b2": w(keys[11], (D,)),
        "gamma1": 1.0 + w(keys[12], (D,)), "beta1": w(keys[13], (D,)),
        "gamma2": 1.0 + w(keys[14], (D,)), "beta2": w(keys[15], (D,)),
    }

    x = jax.random.normal(keys[16], (B, S, D), dtype=jnp.float32)

    # Key-padding mask (True = masked): mask the last 16 key positions of batch element 1.
    key_pad = jnp.zeros((B, S), dtype=bool).at[1, -16:].set(True)
    key_full = jnp.broadcast_to(key_pad[:, None, :], (B, S, S))   # same mask in (B,S,S) form

    ref = _reference(x, key_pad, params, n_heads=n_heads)

    # 1) f32 compute path + full (B,S,S) mask: semantics check against the pure-JAX reference.
    out_f32 = jax.block_until_ready(
        qbw_encoder_layer(x, key_full, params, n_heads=n_heads, q_tile=q_tile,
                          compute_dtype=jnp.float32))
    assert out_f32.shape == (B, S, D)
    err_f32 = float(jnp.max(jnp.abs(out_f32 - ref)))
    assert jnp.allclose(out_f32, ref, atol=2e-3, rtol=2e-3), err_f32

    # 2) default bf16-MXU path + (B,S) key-padding mask (production config).
    out_bf16 = jax.block_until_ready(
        qbw_encoder_layer(x, key_pad, params, n_heads=n_heads, q_tile=q_tile))
    err_bf16 = float(jnp.max(jnp.abs(out_bf16 - ref)))
    assert jnp.allclose(out_bf16, ref, atol=5e-2, rtol=5e-2), err_bf16

    # TODO(synk): dropout1/dropout2 are inference-mode identities; training-mode dropout RNG and
    # the QBWLinear quantized *backward* (op_scale / op_scale_bw) are out of scope for a forward kernel.
    print("KERNEL_OK")
</pallas_src>

<mosaic_0001>
module attributes {stable_mosaic.version = 11 : i64} {
  func.func @_kv_proj_kernel(%arg0: i32, %arg1: i32, %arg2: memref<1x64x128xf32, #tpu.memory_space<vmem>>, %arg3: memref<128x128xf32, #tpu.memory_space<vmem>>, %arg4: memref<1x128xf32, #tpu.memory_space<vmem>>, %arg5: memref<128x128xf32, #tpu.memory_space<vmem>>, %arg6: memref<1x128xf32, #tpu.memory_space<vmem>>, %arg7: memref<1x64x128xf32, #tpu.memory_space<vmem>>, %arg8: memref<1x64x128xf32, #tpu.memory_space<vmem>>) attributes {dimension_semantics = [#tpu.dimension_semantics<parallel>, #tpu.dimension_semantics<parallel>], iteration_bounds = array<i64: 2, 2>, scalar_prefetch = 0 : i64, scratch_operands = 0 : i64, tpu.core_type = #tpu.core_type<tc>, window_params = [{transform_indices = @transform_0, window_bounds = array<i64: 1, 64, 128>}, {pipeline_mode = #tpu.pipeline_mode<synchronous>, transform_indices = @transform_1, window_bounds = array<i64: 128, 128>}, {pipeline_mode = #tpu.pipeline_mode<synchronous>, transform_indices = @transform_2, window_bounds = array<i64: 1, 128>}, {pipeline_mode = #tpu.pipeline_mode<synchronous>, transform_indices = @transform_3, window_bounds = array<i64: 128, 128>}, {pipeline_mode = #tpu.pipeline_mode<synchronous>, transform_indices = @transform_4, window_bounds = array<i64: 1, 128>}, {transform_indices = @transform_5, window_bounds = array<i64: 1, 64, 128>}, {transform_indices = @transform_6, window_bounds = array<i64: 1, 64, 128>}]} {
    %c0 = arith.constant 0 : index
    %c0_0 = arith.constant 0 : index
    %c0_1 = arith.constant 0 : index
    %0 = vector.load %arg2[%c0, %c0_0, %c0_1] : memref<1x64x128xf32, #tpu.memory_space<vmem>>, vector<1x64x128xf32>
    %1 = vector.shape_cast %0 : vector<1x64x128xf32> to vector<64x128xf32>
    %c0_2 = arith.constant 0 : index
    %c0_3 = arith.constant 0 : index
    %2 = vector.load %arg3[%c0_2, %c0_3] : memref<128x128xf32, #tpu.memory_space<vmem>>, vector<128x128xf32>
    %cst = arith.constant dense<0.000000e+00> : vector<64x128xf32>
    %3 = tpu.matmul %1, %2, %cst {dimension_numbers = #tpu.dot_dimension_numbers<[1], [0], [0], [1], [0, 0, 1, 1], [], []>} : vector<64x128xf32>, vector<128x128xf32>, vector<64x128xf32> -> vector<64x128xf32>
    %c0_4 = arith.constant 0 : index
    %c0_5 = arith.constant 0 : index
    %4 = vector.load %arg4[%c0_4, %c0_5] : memref<1x128xf32, #tpu.memory_space<vmem>>, vector<1x128xf32>
    %5 = vector.broadcast %4 : vector<1x128xf32> to vector<64x128xf32>
    %6 = arith.addf %3, %5 : vector<64x128xf32>
    %c0_6 = arith.constant 0 : index
    %c0_7 = arith.constant 0 : index
    %7 = vector.load %arg5[%c0_6, %c0_7] : memref<128x128xf32, #tpu.memory_space<vmem>>, vector<128x128xf32>
    %cst_8 = arith.constant dense<0.000000e+00> : vector<64x128xf32>
    %8 = tpu.matmul %1, %7, %cst_8 {dimension_numbers = #tpu.dot_dimension_numbers<[1], [0], [0], [1], [0, 0, 1, 1], [], []>} : vector<64x128xf32>, vector<128x128xf32>, vector<64x128xf32> -> vector<64x128xf32>
    %c0_9 = arith.constant 0 : index
    %c0_10 = arith.constant 0 : index
    %9 = vector.load %arg6[%c0_9, %c0_10] : memref<1x128xf32, #tpu.memory_space<vmem>>, vector<1x128xf32>
    %10 = vector.broadcast %9 : vector<1x128xf32> to vector<64x128xf32>
    %11 = arith.addf %8, %10 : vector<64x128xf32>
    %c0_11 = arith.constant 0 : index
    %c0_12 = arith.constant 0 : index
    %c0_13 = arith.constant 0 : index
    %12 = vector.load %arg7[%c0_11, %c0_12, %c0_13] : memref<1x64x128xf32, #tpu.memory_space<vmem>>, vector<1x64x128xf32>
    %13 = vector.shape_cast %12 : vector<1x64x128xf32> to vector<64x128xf32>
    %14 = vector.shape_cast %6 : vector<64x128xf32> to vector<1x64x128xf32>
    tpu.vector_store %arg7[%c0_11, %c0_12, %c0_13], %14 {strides = array<i32>} : memref<1x64x128xf32, #tpu.memory_space<vmem>>, vector<1x64x128xf32>,
    %c0_14 = arith.constant 0 : index
    %c0_15 = arith.constant 0 : index
    %c0_16 = arith.constant 0 : index
    %15 = vector.load %arg8[%c0_14, %c0_15, %c0_16] : memref<1x64x128xf32, #tpu.memory_space<vmem>>, vector<1x64x128xf32>
    %16 = vector.shape_cast %15 : vector<1x64x128xf32> to vector<64x128xf32>
    %17 = vector.shape_cast %11 : vector<64x128xf32> to vector<1x64x128xf32>
    tpu.vector_store %arg8[%c0_14, %c0_15, %c0_16], %17 {strides = array<i32>} : memref<1x64x128xf32, #tpu.memory_space<vmem>>, vector<1x64x128xf32>,
    return
  }
  func.func @transform_0(%arg0: i32, %arg1: i32) -> (i32, i32, i32) {
    %c0_i32 = arith.constant 0 : i32
    %c0_i32_0 = arith.constant 0 : i32
    return %arg0, %arg1, %c0_i32 : i32, i32, i32
  }
  func.func @transform_1(%arg0: i32, %arg1: i32) -> (i32, i32) {
    %c0_i32 = arith.constant 0 : i32
    %c0_i32_0 = arith.constant 0 : i32
    %c0_i32_1 = arith.constant 0 : i32
    return %c0_i32, %c0_i32_0 : i32, i32
  }
  func.func @transform_2(%arg0: i32, %arg1: i32) -> (i32, i32) {
    %c0_i32 = arith.constant 0 : i32
    %c0_i32_0 = arith.constant 0 : i32
    %c0_i32_1 = arith.constant 0 : i32
    return %c0_i32, %c0_i32_0 : i32, i32
  }
  func.func @transform_3(%arg0: i32, %arg1: i32) -> (i32, i32) {
    %c0_i32 = arith.constant 0 : i32
    %c0_i32_0 = arith.constant 0 : i32
    %c0_i32_1 = arith.constant 0 : i32
    return %c0_i32, %c0_i32_0 : i32, i32
  }
  func.func @transform_4(%arg0: i32, %arg1: i32) -> (i32, i32) {
    %c0_i32 = arith.constant 0 : i32
    %c0_i32_0 = arith.constant 0 : i32
    %c0_i32_1 = arith.constant 0 : i32
    return %c0_i32, %c0_i32_0 : i32, i32
  }
  func.func @transform_5(%arg0: i32, %arg1: i32) -> (i32, i32, i32) {
    %c0_i32 = arith.constant 0 : i32
    %c0_i32_0 = arith.constant 0 : i32
    return %arg0, %arg1, %c0_i32 : i32, i32, i32
  }
  func.func @transform_6(%arg0: i32, %arg1: i32) -> (i32, i32, i32) {
    %c0_i32 = arith.constant 0 : i32
    %c0_i32_0 = arith.constant 0 : i32
    return %arg0, %arg1, %c0_i32 : i32, i32, i32
  }
}

</mosaic_0001>

<llo_original>
// kernel: tpu_custom_call.1
$region0: #{tpu_custom_call.1}
  #allocation0 [shape = 'u32[]', space=smem, size = 0x4, offset = 0x4, fixed_abs, tag = 'smem constant byte address 0x4 - core index']
  #allocation1 [shape = 'u32[72,128]{1,0:T(1,128)}', space=vmem, size = 0x9000, scoped, tag = 'internal scratch']
  %s0 = inlined_call_operand.hbm [shape: f32[2,128,128], index: 0, kind: input, shape index: {}]
  %s1 = inlined_call_operand.hbm [shape: f32[128,128], index: 1, kind: input, shape index: {}]
  %s2 = inlined_call_operand.vmem [shape: f32[1,128], index: 2, kind: input, shape index: {}]
  %s3 = inlined_call_operand.hbm [shape: f32[128,128], index: 3, kind: input, shape index: {}]
  %s4 = inlined_call_operand.vmem [shape: f32[1,128], index: 4, kind: input, shape index: {}]
  %s5 = inlined_call_operand.hbm [shape: f32[2,128,128], index: 5, kind: output, shape index: {0}]
  %s6 = inlined_call_operand.hbm [shape: f32[2,128,128], index: 6, kind: output, shape index: {1}]
  %7 = xla_tuple %s5, %s6
  %s8 = sld [smem:[#allocation0]]
  $region73: #{tpu_custom_call.1} parent=0
    _
  %s10 = ssub.s32 1, %s8
  %s11 = scalar_select 0, %s10, %s8
  $region1: #{tpu_custom_call.1} parent=0
    #allocation2 [shape = 'u8[65536]{0}', space=vmem, size = 0x10000, scoped, tag = 'input window, operand 0']
    #allocation3 [shape = 's32[2]{0}', space=sflag, size = 0x8, scoped, tag = 'scoped memory for tpu_custom_call.1']
    #allocation4 [shape = 's32[2]{0}', space=sflag, size = 0x8, scoped, tag = 'scoped memory for tpu_custom_call.1']
    #allocation5 [shape = 'u8[65536]{0}', space=vmem, size = 0x10000, scoped, tag = 'input window, operand 1, single buffered']
    #allocation6 [shape = 's32[1]{0}', space=sflag, size = 0x4, scoped, tag = 'scoped memory for tpu_custom_call.1']
    #allocation7 [shape = 'u8[65536]{0}', space=vmem, size = 0x10000, scoped, tag = 'input window, operand 3, single buffered']
    #allocation8 [shape = 'u8[65536]{0}', space=vmem, size = 0x10000, scoped, tag = 'output window, operand 0']
    #allocation9 [shape = 'u8[65536]{0}', space=vmem, size = 0x10000, scoped, tag = 'output window, operand 1']
    #allocation10 [shape = 's32[2]{0}', space=sflag, size = 0x8, scoped, tag = 'scoped memory for tpu_custom_call.1']
    %12 = vsyncpa [#allocation3], 0
    %s13 = scalar_lea.sflag [#allocation3], 1
    %14 = vsyncpa %s13, 0
    %15 = vsyncpa [#allocation6], 0
    %16 = vsyncpa [#allocation4], 0
    %s17 = scalar_lea.sflag [#allocation4], 1
    %18 = vsyncpa %s17, 0
    %19 = vsyncpa [#allocation10], 0
    %s20 = scalar_lea.sflag [#allocation10], 1
    %21 = vsyncpa %s20, 0
    loop: start=0, step=1, limit=6
    $region2: #{tpu_custom_call.1} parent=1 // loop_pre_header
      _
    $region3: #{tpu_custom_call.1} parent=1 // loop_header
      %s23 = sphi 0, %s27
      %p24 = scmp.ge.s32.totalorder %s23, 6
      %s30 = sphi 0, %s42
      %s31 = sphi 0, %s38
      %s32 = sphi 0, %s30
      %s33 = sphi 0, %s31
      %s34 = sphi 0, %s32
      %s35 = sphi 0, %s33
      %s47 = sphi 0, %s49
      %s50 = sphi 0, %s47
      %s51 = sphi 0, %s50
      %s67 = sphi 0, %s51
      %s71 = sphi 0, %s71
      %s73 = sphi 0, %s71
      %s74 = sphi 0, %s73
      %s88 = sphi 0, %s74
      %s92 = sphi 0, %s92
      %s94 = sphi 0, %s92
      %s95 = sphi 0, %s94
      %s109 = sphi 0, %s95
      %s113 = sphi 0, %s113
      %s115 = sphi 0, %s113
      %s116 = sphi 0, %s115
      %s130 = sphi 0, %s116
      %s134 = sphi 0, %s134
      %s136 = sphi 0, %s134
      %s137 = sphi 0, %s136
      %s151 = sphi 0, %s137
      %s159 = sphi 0, %s161
      %s162 = sphi 0, %s159
      %s163 = sphi 0, %s162
      %s179 = sphi 0, %s163
      %s187 = sphi 0, %s189
      %s190 = sphi 0, %s187
      %s191 = sphi 0, %s190
      %s207 = sphi 0, %s191
    $region4: #{tpu_custom_call.1} parent=1 // loop_header_branch
      %26 = sbr.rel (%p24) target = $region8
    $region5: #{tpu_custom_call.1} parent=1 // loop_body
      %s28 = ssub.s32 %s23, 1
      %s29 = ssub.s32 %s23, 2
      %s36 = sadd.s32 1, %s31
      %p37 = scmp.ge.s32.totalorder %s36, 2
      %s38 = scalar_select %p37, 0, %s36
      %s39 = sadd.s32 1, %s30
      %s40 = scalar_select %p37, %s39, %s30
      %p41 = scmp.ge.s32.totalorder %s40, 2
      %s42 = scalar_select %p41, 0, %s40
      %s43 = ssub.s32 %s30, %s42
      %s44 = ssub.s32 %s31, %s38
      %s45 = sor.u32 %s43, %s44
      %p46 = scmp.eq.s32.totalorder %s45, 0
      %s48 = sadd.s32 %s47, 1
      %s49 = scalar_select %p46, %s47, %s48
      %p52 = pneg %p46
      %p53 = scmp.eq.s32.totalorder %s23, 3
      %p54 = por %p52, %p53
      %p55 = scmp.ne.s32.totalorder %s47, %s50
      %p56 = scmp.eq.s32.totalorder %s23, 0
      %p57 = por %p55, %p56
      %p58 = scmp.ne.s32.totalorder %s47, %s50
      %p59 = scmp.eq.s32.totalorder %s28, 3
      %p60 = por %p58, %p59
      %p61 = scmp.ne.s32.totalorder %s50, %s51
      %p62 = scmp.eq.s32.totalorder %s28, 0
      %p63 = por %p61, %p62
      %p64 = scmp.ne.s32.totalorder %s50, %s51
      %p65 = scmp.eq.s32.totalorder %s29, 3
      %p66 = por %p64, %p65
      %p68 = scmp.ne.s32.totalorder %s51, %s67
      %p69 = scmp.eq.s32.totalorder %s29, 0
      %p70 = por %p68, %p69
      %s72 = sadd.s32 %s71, 1
      %p75 = scmp.eq.s32.totalorder %s23, 3
      %p76 = scmp.ne.s32.totalorder %s71, %s73
      %p77 = scmp.eq.s32.totalorder %s23, 0
      %p78 = por %p76, %p77
      %p79 = scmp.ne.s32.totalorder %s71, %s73
      %p80 = scmp.eq.s32.totalorder %s28, 3
      %p81 = por %p79, %p80
      %p82 = scmp.ne.s32.totalorder %s73, %s74
      %p83 = scmp.eq.s32.totalorder %s28, 0
      %p84 = por %p82, %p83
      %p85 = scmp.ne.s32.totalorder %s73, %s74
      %p86 = scmp.eq.s32.totalorder %s29, 3
      %p87 = por %p85, %p86
      %p89 = scmp.ne.s32.totalorder %s74, %s88
      %p90 = scmp.eq.s32.totalorder %s29, 0
      %p91 = por %p89, %p90
      %s93 = sadd.s32 %s92, 1
      %p96 = scmp.eq.s32.totalorder %s23, 3
      %p97 = scmp.ne.s32.totalorder %s92, %s94
      %p98 = scmp.eq.s32.totalorder %s23, 0
      %p99 = por %p97, %p98
      %p100 = scmp.ne.s32.totalorder %s92, %s94
      %p101 = scmp.eq.s32.totalorder %s28, 3
      %p102 = por %p100, %p101
      %p103 = scmp.ne.s32.totalorder %s94, %s95
      %p104 = scmp.eq.s32.totalorder %s28, 0
      %p105 = por %p103, %p104
      %p106 = scmp.ne.s32.totalorder %s94, %s95
      %p107 = scmp.eq.s32.totalorder %s29, 3
      %p108 = por %p106, %p107
      %p110 = scmp.ne.s32.totalorder %s95, %s109
      %p111 = scmp.eq.s32.totalorder %s29, 0
      %p112 = por %p110, %p111
      %s114 = sadd.s32 %s113, 1
      %p117 = scmp.eq.s32.totalorder %s23, 3
      %p118 = scmp.ne.s32.totalorder %s113, %s115
      %p119 = scmp.eq.s32.totalorder %s23, 0
      %p120 = por %p118, %p119
      %p121 = scmp.ne.s32.totalorder %s113, %s115
      %p122 = scmp.eq.s32.totalorder %s28, 3
      %p123 = por %p121, %p122
      %p124 = scmp.ne.s32.totalorder %s115, %s116
      %p125 = scmp.eq.s32.totalorder %s28, 0
      %p126 = por %p124, %p125
      %p127 = scmp.ne.s32.totalorder %s115, %s116
      %p128 = scmp.eq.s32.totalorder %s29, 3
      %p129 = por %p127, %p128
      %p131 = scmp.ne.s32.totalorder %s116, %s130
      %p132 = scmp.eq.s32.totalorder %s29, 0
      %p133 = por %p131, %p132
      %s135 = sadd.s32 %s134, 1
      %p138 = scmp.eq.s32.totalorder %s23, 3
      %p139 = scmp.ne.s32.totalorder %s134, %s136
      %p140 = scmp.eq.s32.totalorder %s23, 0
      %p141 = por %p139, %p140
      %p142 = scmp.ne.s32.totalorder %s134, %s136
      %p143 = scmp.eq.s32.totalorder %s28, 3
      %p144 = por %p142, %p143
      %p145 = scmp.ne.s32.totalorder %s136, %s137
      %p146 = scmp.eq.s32.totalorder %s28, 0
      %p147 = por %p145, %p146
      %p148 = scmp.ne.s32.totalorder %s136, %s137
      %p149 = scmp.eq.s32.totalorder %s29, 3
      %p150 = por %p148, %p149
      %p152 = scmp.ne.s32.totalorder %s137, %s151
      %p153 = scmp.eq.s32.totalorder %s29, 0
      %p154 = por %p152, %p153
      %s155 = ssub.s32 %s30, %s42
      %s156 = ssub.s32 %s31, %s38
      %s157 = sor.u32 %s155, %s156
      %p158 = scmp.eq.s32.totalorder %s157, 0
      %s160 = sadd.s32 %s159, 1
      %s161 = scalar_select %p158, %s159, %s160
      %p164 = pneg %p158
      %p165 = scmp.eq.s32.totalorder %s23, 3
      %p166 = por %p164, %p165
      %p167 = scmp.ne.s32.totalorder %s159, %s162
      %p168 = scmp.eq.s32.totalorder %s23, 0
      %p169 = por %p167, %p168
      %p170 = scmp.ne.s32.totalorder %s159, %s162
      %p171 = scmp.eq.s32.totalorder %s28, 3
      %p172 = por %p170, %p171
      %p173 = scmp.ne.s32.totalorder %s162, %s163
      %p174 = scmp.eq.s32.totalorder %s28, 0
      %p175 = por %p173, %p174
      %p176 = scmp.ne.s32.totalorder %s162, %s163
      %p177 = scmp.eq.s32.totalorder %s29, 3
      %p178 = por %p176, %p177
      %p180 = scmp.ne.s32.totalorder %s163, %s179
      %p181 = scmp.eq.s32.totalorder %s29, 0
      %p182 = por %p180, %p181
      %s183 = ssub.s32 %s30, %s42
      %s184 = ssub.s32 %s31, %s38
      %s185 = sor.u32 %s183, %s184
      %p186 = scmp.eq.s32.totalorder %s185, 0
      %s188 = sadd.s32 %s187, 1
      %s189 = scalar_select %p186, %s187, %s188
      %p192 = pneg %p186
      %p193 = scmp.eq.s32.totalorder %s23, 3
      %p194 = por %p192, %p193
      %p195 = scmp.ne.s32.totalorder %s187, %s190
      %p196 = scmp.eq.s32.totalorder %s23, 0
      %p197 = por %p195, %p196
      %p198 = scmp.ne.s32.totalorder %s187, %s190
      %p199 = scmp.eq.s32.totalorder %s28, 3
      %p200 = por %p198, %p199
      %p201 = scmp.ne.s32.totalorder %s190, %s191
      %p202 = scmp.eq.s32.totalorder %s28, 0
      %p203 = por %p201, %p202
      %p204 = scmp.ne.s32.totalorder %s190, %s191
      %p205 = scmp.eq.s32.totalorder %s29, 3
      %p206 = por %p204, %p205
      %p208 = scmp.ne.s32.totalorder %s191, %s207
      %p209 = scmp.eq.s32.totalorder %s29, 0
      %p210 = por %p208, %p209
      %p211 = scmp.le.s32.totalorder 1, %s23
      %p212 = scmp.lt.s32.totalorder %s23, 5
      %p213 = pnand %p211, %p212
      %p214 = pneg %p213
      // Predicated region
      $region9: #{tpu_custom_call.1} parent=5 // pred_check
        _
      $region10: #{tpu_custom_call.1} parent=5 // pred_check_branch
        %216 = sbr.rel (%p213) target = $region12
      $region11: #{tpu_custom_call.1} parent=5 // pred_region
        %s217 = ssub.s32 %s23, 1
        // Predicated region
        $region13: #{tpu_custom_call.1} parent=11 // pred_check
          %p218 = pneg %p84
        $region14: #{tpu_custom_call.1} parent=11 // pred_check_branch
          %220 = sbr.rel (%p218) target = $region16
        $region15: #{tpu_custom_call.1} parent=11 // pred_region
          %222 = vsyncadd [#allocation6], 0
          %s223 = sshll.u32 %s1, 4
          %s224 = int_to_ptr.hbm [resolvable:$true] %s223
          %s225 = sshll.u32 [#allocation5], 4
          %s226 = int_to_ptr.vmem [resolvable:$true] %s225
          %231 = dma.hbm_to_vmem [thread:$0]  %s224, 2048, %s226, [#allocation6], 128, 128, 8
        $region16: #{tpu_custom_call.1} parent=11 // pred_fallthru
          _
        // Predicated region
        $region17: #{tpu_custom_call.1} parent=11 // pred_check
          %p232 = pneg %p105
        $region18: #{tpu_custom_call.1} parent=11 // pred_check_branch
          %234 = sbr.rel (%p232) target = $region20
        $region19: #{tpu_custom_call.1} parent=11 // pred_region
          _
        $region20: #{tpu_custom_call.1} parent=11 // pred_fallthru
          _
        // Predicated region
        $region21: #{tpu_custom_call.1} parent=11 // pred_check
          %p235 = pneg %p126
        $region22: #{tpu_custom_call.1} parent=11 // pred_check_branch
          %237 = sbr.rel (%p235) target = $region24
        $region23: #{tpu_custom_call.1} parent=11 // pred_region
          %239 = vsyncadd [#allocation6], 0
          %s240 = sshll.u32 %s3, 4
          %s241 = int_to_ptr.hbm [resolvable:$true] %s240
          %s242 = sshll.u32 [#allocation7], 4
          %s243 = int_to_ptr.vmem [resolvable:$true] %s242
          %248 = dma.hbm_to_vmem [thread:$0]  %s241, 2048, %s243, [#allocation6], 128, 128, 8
        $region24: #{tpu_custom_call.1} parent=11 // pred_fallthru
          _
        // Predicated region
        $region25: #{tpu_custom_call.1} parent=11 // pred_check
          %p249 = pneg %p147
        $region26: #{tpu_custom_call.1} parent=11 // pred_check_branch
          %251 = sbr.rel (%p249) target = $region28
        $region27: #{tpu_custom_call.1} parent=11 // pred_region
          _
        $region28: #{tpu_custom_call.1} parent=11 // pred_fallthru
          _
      $region12: #{tpu_custom_call.1} parent=5 // pred_fallthru
        _
      %p252 = scmp.lt.s32.totalorder %s23, 4
      // Predicated region
      $region29: #{tpu_custom_call.1} parent=5 // pred_check
        %p253 = pneg %p252
      $region30: #{tpu_custom_call.1} parent=5 // pred_check_branch
        %255 = sbr.rel (%p253) target = $region32
      $region31: #{tpu_custom_call.1} parent=5 // pred_region
        // Predicated region
        $region33: #{tpu_custom_call.1} parent=31 // pred_check
          %p256 = pneg %p57
        $region34: #{tpu_custom_call.1} parent=31 // pred_check_branch
          %258 = sbr.rel (%p256) target = $region36
        $region35: #{tpu_custom_call.1} parent=31 // pred_region
          %s259 = sand.u32 %s47, 1
          %s260 = scalar_lea.sflag [#allocation3], %s259
          %s261 = sand.u32 %s47, 1
          %s262 = smul.addr %s261, 64
          %s263 = scalar_lea.vmem [#allocation2], %s262
          %s264 = smul.u32 8, %s31
          %266 = vsyncadd %s260, 0
          %s267 = smul.addr %s30, 16
          %s268 = sadd.s32 %s264, %s267
          %s269 = smul.addr %s268, 8
          %s270 = scalar_lea.hbm %s0, %s269
          %s271 = sshll.u32 %s270, 4
          %s272 = int_to_ptr.hbm [resolvable:$true] %s271
          %s273 = sshll.u32 %s263, 4
          %s274 = int_to_ptr.vmem [resolvable:$true] %s273
          %279 = dma.hbm_to_vmem [thread:$0]  %s272, 1024, %s274, %s260, 128, 128, 8
        $region36: #{tpu_custom_call.1} parent=31 // pred_fallthru
          _
      $region32: #{tpu_custom_call.1} parent=5 // pred_fallthru
        _
      %p280 = scmp.le.s32.totalorder 1, %s23
      %p281 = scmp.lt.s32.totalorder %s23, 5
      %p282 = pnand %p280, %p281
      %p283 = pneg %p282
      // Predicated region
      $region37: #{tpu_custom_call.1} parent=5 // pred_check
        _
      $region38: #{tpu_custom_call.1} parent=5 // pred_check_branch
        %285 = sbr.rel (%p282) target = $region40
      $region39: #{tpu_custom_call.1} parent=5 // pred_region
        %s286 = ssub.s32 %s23, 1
        %s287 = sand.u32 %s50, 1
        %s288 = scalar_lea.sflag [#allocation3], %s287
        %s289 = sand.u32 %s50, 1
        %s290 = smul.addr %s289, 64
        %s291 = scalar_lea.vmem [#allocation2], %s290
        // Predicated region
        $region41: #{tpu_custom_call.1} parent=39 // pred_check
          %p292 = pneg %p63
        $region42: #{tpu_custom_call.1} parent=39 // pred_check_branch
          %294 = sbr.rel (%p292) target = $region44
        $region43: #{tpu_custom_call.1} parent=39 // pred_region
          %296 = dma.done %s288, 1024
        $region44: #{tpu_custom_call.1} parent=39 // pred_fallthru
          _
        // Predicated region
        $region45: #{tpu_custom_call.1} parent=39 // pred_check
          %p297 = pneg %p84
        $region46: #{tpu_custom_call.1} parent=39 // pred_check_branch
          %299 = sbr.rel (%p297) target = $region48
        $region47: #{tpu_custom_call.1} parent=39 // pred_region
          %301 = dma.done [#allocation6], 2048
        $region48: #{tpu_custom_call.1} parent=39 // pred_fallthru
          _
        // Predicated region
        $region49: #{tpu_custom_call.1} parent=39 // pred_check
          %p302 = pneg %p126
        $region50: #{tpu_custom_call.1} parent=39 // pred_check_branch
          %304 = sbr.rel (%p302) target = $region52
        $region51: #{tpu_custom_call.1} parent=39 // pred_region
          %306 = dma.done [#allocation6], 2048
        $region52: #{tpu_custom_call.1} parent=39 // pred_fallthru
          _
        %s307 = sand.u32 %s50, 1
        %s308 = scalar_lea.sflag [#allocation3], %s307
        %s309 = sand.u32 %s50, 1
        %s310 = smul.addr %s309, 64
        %s311 = scalar_lea.vmem [#allocation2], %s310
        %p312 = pneg %p63
        %p313 = pneg %p60
        %p314 = pneg %p84
        %p315 = pneg %p81
        %p316 = pneg %p105
        %p317 = pneg %p102
        %p318 = pneg %p126
        %p319 = pneg %p123
        %p320 = pneg %p147
        %p321 = pneg %p144
        %p322 = pneg %p175
        %p323 = pneg %p172
        %s324 = sand.u32 %s162, 1
        %s325 = scalar_lea.sflag [#allocation4], %s324
        %s326 = sand.u32 %s162, 1
        %s327 = smul.addr %s326, 64
        %s328 = scalar_lea.vmem [#allocation8], %s327
        %p329 = pneg %p203
        %p330 = pneg %p200
        %s331 = sand.u32 %s190, 1
        %s332 = scalar_lea.sflag [#allocation10], %s331
        %s333 = sand.u32 %s190, 1
        %s334 = smul.addr %s333, 64
        %s335 = scalar_lea.vmem [#allocation9], %s334
        %s336 = smul.u32 8, %s33
        %s337 = smul.u32 8, %s33
        %s338 = smul.u32 8, %s33
        %v339 = vld [vmem:[%s291] sm:$0xff]
        %v340 = vld [vmem:[%s291 + $0x8] sm:$0xff]
        %v341 = vld [vmem:[%s291 + $0x10] sm:$0xff]
        %v342 = vld [vmem:[%s291 + $0x18] sm:$0xff]
        %v343 = vld [vmem:[%s291 + $0x20] sm:$0xff]
        %v344 = vld [vmem:[%s291 + $0x28] sm:$0xff]
        %v345 = vld [vmem:[%s291 + $0x30] sm:$0xff]
        %v346 = vld [vmem:[%s291 + $0x38] sm:$0xff]
        %v347 = vld [vmem:[#allocation5] sm:$0xff]
        %v348 = vld [vmem:[#allocation5 + $0x8] sm:$0xff]
        %v349 = vld [vmem:[#allocation5 + $0x10] sm:$0xff]
        %v350 = vld [vmem:[#allocation5 + $0x18] sm:$0xff]
        %v351 = vld [vmem:[#allocation5 + $0x20] sm:$0xff]
        %v352 = vld [vmem:[#allocation5 + $0x28] sm:$0xff]
        %v353 = vld [vmem:[#allocation5 + $0x30] sm:$0xff]
        %v354 = vld [vmem:[#allocation5 + $0x38] sm:$0xff]
        %v355 = vld [vmem:[#allocation5 + $0x40] sm:$0xff]
        %v356 = vld [vmem:[#allocation5 + $0x48] sm:$0xff]
        %v357 = vld [vmem:[#allocation5 + $0x50] sm:$0xff]
        %v358 = vld [vmem:[#allocation5 + $0x58] sm:$0xff]
        %v359 = vld [vmem:[#allocation5 + $0x60] sm:$0xff]
        %v360 = vld [vmem:[#allocation5 + $0x68] sm:$0xff]
        %v361 = vld [vmem:[#allocation5 + $0x70] sm:$0xff]
        %v362 = vld [vmem:[#allocation5 + $0x78] sm:$0xff]
        %v363 = vld [vmem:[%s2] sm:$0x1]
        %v365 = vperm.slane %v363, 0
        %367 = vmatpush.msra.mxu0 %v362
        %368 = vmatpush.msra.mxu0 %v361
        %369 = vmatpush.msra.mxu0 %v360
        %370 = vmatpush.msra.mxu0 %v359
        %371 = vmatpush.msra.mxu0 %v358
        %372 = vmatpush.msra.mxu0 %v357
        %373 = vmatpush.msra.mxu0 %v356
        %374 = vmatpush.msra.mxu0 %v355
        %375 = vmatpush.msra.mxu0 %v354
        %376 = vmatpush.msra.mxu0 %v353
        %377 = vmatpush.msra.mxu0 %v352
        %378 = vmatpush.msra.mxu0 %v351
        %379 = vmatpush.msra.mxu0 %v350
        %380 = vmatpush.msra.mxu0 %v349
        %381 = vmatpush.msra.mxu0 %v348
        %382 = vmatpush.msra.mxu0 %v347
        %383 = vmatmul.f32.gmra.mxu0 %v339
        %v384 = vpop.f32.mrf.mxu0
        %v385 = vadd.f32 %v365, %v384
        %386 = vmatmul.f32.gmra.mxu0 %v340
        %v387 = vpop.f32.mrf.mxu0
        %v388 = vadd.f32 %v365, %v387
        %389 = vmatmul.f32.gmra.mxu0 %v341
        %v390 = vpop.f32.mrf.mxu0
        %v391 = vadd.f32 %v365, %v390
        %392 = vmatmul.f32.gmra.mxu0 %v342
        %v393 = vpop.f32.mrf.mxu0
        %v394 = vadd.f32 %v365, %v393
        %395 = vmatmul.f32.gmra.mxu0 %v343
        %v396 = vpop.f32.mrf.mxu0
        %v397 = vadd.f32 %v365, %v396
        %398 = vmatmul.f32.gmra.mxu0 %v344
        %v399 = vpop.f32.mrf.mxu0
        %v400 = vadd.f32 %v365, %v399
        %401 = vmatmul.f32.gmra.mxu0 %v345
        %v402 = vpop.f32.mrf.mxu0
        %v403 = vadd.f32 %v365, %v402
        %404 = vmatmul.f32.gmra.mxu0 %v346
        %v405 = vpop.f32.mrf.mxu0
        %v406 = vadd.f32 %v365, %v405
        %407 = vdwg.mxu0
        %v408 = vld [vmem:[#allocation7] sm:$0xff]
        %v409 = vld [vmem:[#allocation7 + $0x8] sm:$0xff]
        %v410 = vld [vmem:[#allocation7 + $0x10] sm:$0xff]
        %v411 = vld [vmem:[#allocation7 + $0x18] sm:$0xff]
        %v412 = vld [vmem:[#allocation7 + $0x20] sm:$0xff]
        %v413 = vld [vmem:[#allocation7 + $0x28] sm:$0xff]
        %v414 = vld [vmem:[#allocation7 + $0x30] sm:$0xff]
        %v415 = vld [vmem:[#allocation7 + $0x38] sm:$0xff]
        %v416 = vld [vmem:[#allocation7 + $0x40] sm:$0xff]
        %v417 = vld [vmem:[#allocation7 + $0x48] sm:$0xff]
        %v418 = vld [vmem:[#allocation7 + $0x50] sm:$0xff]
        %v419 = vld [vmem:[#allocation7 + $0x58] sm:$0xff]
        %v420 = vld [vmem:[#allocation7 + $0x60] sm:$0xff]
        %v421 = vld [vmem:[#allocation7 + $0x68] sm:$0xff]
        %v422 = vld [vmem:[#allocation7 + $0x70] sm:$0xff]
        %v423 = vld [vmem:[#allocation7 + $0x78] sm:$0xff]
        %v424 = vld [vmem:[%s4] sm:$0x1]
        %v426 = vperm.slane %v424, 0
        %428 = vmatpush.msra.mxu0 %v423
        %429 = vmatpush.msra.mxu0 %v422
        %430 = vmatpush.msra.mxu0 %v421
        %431 = vmatpush.msra.mxu0 %v420
        %432 = vmatpush.msra.mxu0 %v419
        %433 = vmatpush.msra.mxu0 %v418
        %434 = vmatpush.msra.mxu0 %v417
        %435 = vmatpush.msra.mxu0 %v416
        %436 = vmatpush.msra.mxu0 %v415
        %437 = vmatpush.msra.mxu0 %v414
        %438 = vmatpush.msra.mxu0 %v413
        %439 = vmatpush.msra.mxu0 %v412
        %440 = vmatpush.msra.mxu0 %v411
        %441 = vmatpush.msra.mxu0 %v410
        %442 = vmatpush.msra.mxu0 %v409
        %443 = vmatpush.msra.mxu0 %v408
        %444 = vmatmul.f32.gmra.mxu0 %v339
        %v445 = vpop.f32.mrf.mxu0
        %v446 = vadd.f32 %v426, %v445
        %447 = vmatmul.f32.gmra.mxu0 %v340
        %v448 = vpop.f32.mrf.mxu0
        %v449 = vadd.f32 %v426, %v448
        %450 = vmatmul.f32.gmra.mxu0 %v341
        %v451 = vpop.f32.mrf.mxu0
        %v452 = vadd.f32 %v426, %v451
        %453 = vmatmul.f32.gmra.mxu0 %v342
        %v454 = vpop.f32.mrf.mxu0
        %v455 = vadd.f32 %v426, %v454
        %456 = vmatmul.f32.gmra.mxu0 %v343
        %v457 = vpop.f32.mrf.mxu0
        %v458 = vadd.f32 %v426, %v457
        %459 = vmatmul.f32.gmra.mxu0 %v344
        %v460 = vpop.f32.mrf.mxu0
        %v461 = vadd.f32 %v426, %v460
        %462 = vmatmul.f32.gmra.mxu0 %v345
        %v463 = vpop.f32.mrf.mxu0
        %v464 = vadd.f32 %v426, %v463
        %465 = vmatmul.f32.gmra.mxu0 %v346
        %v466 = vpop.f32.mrf.mxu0
        %v467 = vadd.f32 %v426, %v466
        %468 = vdwg.mxu0
        %469 = vst [vmem:[%s328] sm:$0xff] %v385
        %470 = vst [vmem:[%s328 + $0x8] sm:$0xff] %v388
        %471 = vst [vmem:[%s328 + $0x10] sm:$0xff] %v391
        %472 = vst [vmem:[%s328 + $0x18] sm:$0xff] %v394
        %473 = vst [vmem:[%s328 + $0x20] sm:$0xff] %v397
        %474 = vst [vmem:[%s328 + $0x28] sm:$0xff] %v400
        %475 = vst [vmem:[%s328 + $0x30] sm:$0xff] %v403
        %476 = vst [vmem:[%s328 + $0x38] sm:$0xff] %v406
        %477 = vst [vmem:[%s335] sm:$0xff] %v446
        %478 = vst [vmem:[%s335 + $0x8] sm:$0xff] %v449
        %479 = vst [vmem:[%s335 + $0x10] sm:$0xff] %v452
        %480 = vst [vmem:[%s335 + $0x18] sm:$0xff] %v455
        %481 = vst [vmem:[%s335 + $0x20] sm:$0xff] %v458
        %482 = vst [vmem:[%s335 + $0x28] sm:$0xff] %v461
        %483 = vst [vmem:[%s335 + $0x30] sm:$0xff] %v464
        %484 = vst [vmem:[%s335 + $0x38] sm:$0xff] %v467
        %s485 = sand.u32 %s162, 1
        %s486 = scalar_lea.sflag [#allocation4], %s485
        %s487 = sand.u32 %s162, 1
        %s488 = smul.addr %s487, 64
        %s489 = scalar_lea.vmem [#allocation8], %s488
        %s490 = sand.u32 %s190, 1
        %s491 = scalar_lea.sflag [#allocation10], %s490
        %s492 = sand.u32 %s190, 1
        %s493 = smul.addr %s492, 64
        %s494 = scalar_lea.vmem [#allocation9], %s493
        // Predicated region
        $region53: #{tpu_custom_call.1} parent=39 // pred_check
          %p495 = pneg %p172
        $region54: #{tpu_custom_call.1} parent=39 // pred_check_branch
          %497 = sbr.rel (%p495) target = $region56
        $region55: #{tpu_custom_call.1} parent=39 // pred_region
          %s498 = smul.u32 8, %s33
          %500 = vsyncadd %s486, 0
          %s501 = smul.addr %s32, 16
          %s502 = sadd.s32 %s498, %s501
          %s503 = smul.addr %s502, 8
          %s504 = scalar_lea.hbm %s5, %s503
          %s505 = sshll.u32 %s489, 4
          %s506 = int_to_ptr.vmem [resolvable:$true] %s505
          %s507 = sshll.u32 %s504, 4
          %s508 = int_to_ptr.hbm [resolvable:$true] %s507
          %513 = dma.vmem_to_hbm [thread:$0]  %s506, 1024, %s508, %s486, 128, 128, 8
        $region56: #{tpu_custom_call.1} parent=39 // pred_fallthru
          _
        // Predicated region
        $region57: #{tpu_custom_call.1} parent=39 // pred_check
          %p514 = pneg %p200
        $region58: #{tpu_custom_call.1} parent=39 // pred_check_branch
          %516 = sbr.rel (%p514) target = $region60
        $region59: #{tpu_custom_call.1} parent=39 // pred_region
          %s517 = smul.u32 8, %s33
          %519 = vsyncadd %s491, 0
          %s520 = smul.addr %s32, 16
          %s521 = sadd.s32 %s517, %s520
          %s522 = smul.addr %s521, 8
          %s523 = scalar_lea.hbm %s6, %s522
          %s524 = sshll.u32 %s494, 4
          %s525 = int_to_ptr.vmem [resolvable:$true] %s524
          %s526 = sshll.u32 %s523, 4
          %s527 = int_to_ptr.hbm [resolvable:$true] %s526
          %532 = dma.vmem_to_hbm [thread:$0]  %s525, 1024, %s527, %s491, 128, 128, 8
        $region60: #{tpu_custom_call.1} parent=39 // pred_fallthru
          _
      $region40: #{tpu_custom_call.1} parent=5 // pred_fallthru
        _
      %p533 = scmp.le.s32.totalorder 2, %s23
      // Predicated region
      $region61: #{tpu_custom_call.1} parent=5 // pred_check
        %p534 = pneg %p533
      $region62: #{tpu_custom_call.1} parent=5 // pred_check_branch
        %536 = sbr.rel (%p534) target = $region64
      $region63: #{tpu_custom_call.1} parent=5 // pred_region
        %s537 = ssub.s32 %s23, 2
        // Predicated region
        $region65: #{tpu_custom_call.1} parent=63 // pred_check
          %p538 = pneg %p178
        $region66: #{tpu_custom_call.1} parent=63 // pred_check_branch
          %540 = sbr.rel (%p538) target = $region68
        $region67: #{tpu_custom_call.1} parent=63 // pred_region
          %s541 = sand.u32 %s163, 1
          %s542 = scalar_lea.sflag [#allocation4], %s541
          %s543 = sand.u32 %s163, 1
          %s544 = smul.addr %s543, 64
          %s545 = scalar_lea.vmem [#allocation8], %s544
          %547 = dma.done %s542, 1024
        $region68: #{tpu_custom_call.1} parent=63 // pred_fallthru
          _
        // Predicated region
        $region69: #{tpu_custom_call.1} parent=63 // pred_check
          %p548 = pneg %p206
        $region70: #{tpu_custom_call.1} parent=63 // pred_check_branch
          %550 = sbr.rel (%p548) target = $region72
        $region71: #{tpu_custom_call.1} parent=63 // pred_region
          %s551 = sand.u32 %s191, 1
          %s552 = scalar_lea.sflag [#allocation10], %s551
          %s553 = sand.u32 %s191, 1
          %s554 = smul.addr %s553, 64
          %s555 = scalar_lea.vmem [#allocation9], %s554
          %557 = dma.done %s552, 1024
        $region72: #{tpu_custom_call.1} parent=63 // pred_fallthru
          _
      $region64: #{tpu_custom_call.1} parent=5 // pred_fallthru
        _
    $region6: #{tpu_custom_call.1} parent=1 // loop_footer
      %s27 = sadd.s32 1, %s23
    $region7: #{tpu_custom_call.1} parent=1 // loop_footer_branch
      %22 = sbr.rel target = $region3
    $region8: #{tpu_custom_call.1} parent=1 // loop_exit
      _
    %558 = vsyncpa [#allocation3], 1
    %s559 = scalar_lea.sflag [#allocation3], 1
    %560 = vsyncpa %s559, 1
    %561 = vsyncpa [#allocation6], 1
    %562 = vsyncpa [#allocation4], 1
    %s563 = scalar_lea.sflag [#allocation4], 1
    %564 = vsyncpa %s563, 1
    %565 = vsyncpa [#allocation10], 1
    %s566 = scalar_lea.sflag [#allocation10], 1
    %567 = vsyncpa %s566, 1

</llo_original>
